<compile_context>
chip_gen: v7x
topology: tpu7x:2x2x1
jax: 0.10.0
libtpu: 0.0.40
codegen_flags: <defaults>
</compile_context>

<pallas_src>
import functools

import jax
import jax.numpy as jnp
from jax import lax
from jax.experimental import pallas as pl
from jax.experimental.pallas import tpu as pltpu

_L_TILE = 512  # output-length tile (multiple of 128) used once L_out exceeds it


def _accum_taps(xe, w, *, ksize, dilation, stride, t_out):
    """Accumulate the dilated-conv taps with VPU broadcast FMAs.

    xe: (nb, C_in, >= (t_out-1)*stride + 1 + (ksize-1)*dilation)  input window (value)
    w:  (ksize*C_in, C_out, 1) float32; row k*C_in+ci holds weight[:, ci, k]
    returns (nb, C_out, t_out) float32
    """
    nb, c_in, _ = xe.shape
    c_out = w.shape[1]
    span = (t_out - 1) * stride + 1
    acc = jnp.zeros((nb, c_out, t_out), jnp.float32)
    for k in range(ksize):                      # static unroll over taps
        start = k * dilation                    # static lane offset
        if stride == 1:
            xk = xe[:, :, start:start + t_out]
        else:
            # TODO(synk): strided lane slice of a value (XLU-heavy); correct but slow.
            xk = lax.slice(xe, (0, 0, start), (nb, c_in, start + span), (1, 1, stride))
        xk = xk.astype(jnp.float32)
        for ci in range(c_in):                  # static unroll over input channels
            # (1, C_out, 1) * (nb, 1, t_out) -> (nb, C_out, t_out): lane/sublane broadcasts
            acc = acc + w[k * c_in + ci][None, :, :] * xk[:, ci:ci + 1, :]
    return acc


def _cdilated_full_kernel(x_ref, w_ref, o_ref, *, ksize, dilation, stride,
                          pad_left, pad_right):
    """Short-sequence path: full L per block, zero padding folded into the kernel."""
    nb, c_in, _ = x_ref.shape
    x = x_ref[...]
    parts = []
    if pad_left:
        parts.append(jnp.zeros((nb, c_in, pad_left), x.dtype))
    parts.append(x)
    if pad_right:
        parts.append(jnp.zeros((nb, c_in, pad_right), x.dtype))
    xe = jnp.concatenate(parts, axis=-1) if len(parts) > 1 else x
    w = w_ref[...].astype(jnp.float32)          # hoisted cast; tiny, resident
    o_ref[...] = _accum_taps(
        xe, w, ksize=ksize, dilation=dilation, stride=stride,
        t_out=o_ref.shape[-1]).astype(o_ref.dtype)


def _cdilated_tiled_kernel(xc_ref, xn_ref, w_ref, o_ref, *, ksize, dilation, stride, halo):
    """Long-sequence path: one output L-tile per step; halo lanes come from the next block."""
    xe = xc_ref[...]
    if halo:
        xe = jnp.concatenate([xe, xn_ref[:, :, :halo]], axis=-1)
    w = w_ref[...].astype(jnp.float32)
    o_ref[...] = _accum_taps(
        xe, w, ksize=ksize, dilation=dilation, stride=stride,
        t_out=o_ref.shape[-1]).astype(o_ref.dtype)


def cdilated_forward(x_ncl, weight_oik, *, stride=1, dilation=1, l_tile=_L_TILE):
    """Forward pass matching PyTorch CDilated (nn.Conv1d, bias=False).

    x_ncl:      (N, C_in, L)        PyTorch NCL input
    weight_oik: (C_out, C_in, K)    PyTorch Conv1d weight
    returns:    (N, C_out, L_out)
    """
    n, c_in, length = x_ncl.shape
    c_out, c_in_w, ksize = weight_oik.shape
    assert c_in == c_in_w
    assert l_tile % 128 == 0

    pad_left = ((ksize - 1) // 2) * dilation    # matches nn.Conv1d padding (even K too)
    l_out = (length + 2 * pad_left - dilation * (ksize - 1) - 1) // stride + 1
    halo = (ksize - 1) * dilation

    # Tiny one-time weight re-layout: (C_out, C_in, K) -> (K*C_in, C_out, 1).
    w_r = jnp.transpose(weight_oik, (2, 1, 0)).reshape(ksize * c_in, c_out)[:, :, None]

    use_tiled = (l_out > l_tile) and (halo <= l_tile * stride)

    if not use_tiled:
        # ---- short-sequence path: grid over batch only, padding done in-kernel ------
        needed = (l_out - 1) * stride + 1 + halo
        pad_right = max(0, needed - length - pad_left)
        kernel = functools.partial(
            _cdilated_full_kernel, ksize=ksize, dilation=dilation, stride=stride,
            pad_left=pad_left, pad_right=pad_right)
        grid = (n,)
        in_specs = [
            pl.BlockSpec((1, c_in, length), lambda i: (i, 0, 0)),
            pl.BlockSpec((ksize * c_in, c_out, 1), lambda i: (0, 0, 0)),
        ]
        out_specs = pl.BlockSpec((1, c_out, l_out), lambda i: (i, 0, 0))
        operands = (x_ncl, w_r)
        dim_sem = ("parallel",)
    else:
        # ---- long-sequence path: grid over (batch, L tiles), halo via a 2nd spec ----
        t_out = l_tile
        t_blk = t_out * stride                   # input lanes consumed per output tile
        l_tiles = -(-l_out // t_out)
        l_pad = max(l_tiles * t_blk + max(halo, 1), length + pad_left)
        # TODO(synk): fold this zero-pad into the kernel too (edge-tile masking).
        x_p = jnp.pad(x_ncl, ((0, 0), (0, 0), (pad_left, l_pad - length - pad_left)))
        kernel = functools.partial(
            _cdilated_tiled_kernel, ksize=ksize, dilation=dilation, stride=stride,
            halo=halo)
        grid = (n, l_tiles)
        in_specs = [
            pl.BlockSpec((1, c_in, t_blk), lambda i, j: (i, 0, j)),       # current slab
            pl.BlockSpec((1, c_in, t_blk), lambda i, j: (i, 0, j + 1)),   # halo source
            pl.BlockSpec((ksize * c_in, c_out, 1), lambda i, j: (0, 0, 0)),
        ]
        out_specs = pl.BlockSpec((1, c_out, t_out), lambda i, j: (i, 0, j))
        operands = (x_p, x_p, w_r)
        dim_sem = ("parallel", "parallel")

    itemsize = x_ncl.dtype.itemsize
    flops = 2 * n * l_out * c_in * c_out * ksize
    bytes_accessed = int(sum(int(op.size) * op.dtype.itemsize for op in operands)
                         + n * c_out * l_out * itemsize)

    return pl.pallas_call(
        kernel,
        out_shape=jax.ShapeDtypeStruct((n, c_out, l_out), x_ncl.dtype),
        grid=grid,
        in_specs=in_specs,
        out_specs=out_specs,
        compiler_params=pltpu.CompilerParams(
            dimension_semantics=dim_sem,
            vmem_limit_bytes=32 * 1024 * 1024,
        ),
        cost_estimate=pl.CostEstimate(
            flops=flops, transcendentals=0, bytes_accessed=bytes_accessed),
    )(*operands)


if __name__ == "__main__":
    # CDilated(nIn=4, nOut=8, kSize=3, stride=1, d=2) at small shapes.
    n_in, n_out, k_size, stride, dilation = 4, 8, 3, 1, 2
    batch, length = 2, 16

    key = jax.random.PRNGKey(0)
    kx, kw, kx2 = jax.random.split(key, 3)
    x = jax.random.normal(kx, (batch, n_in, length), dtype=jnp.float32)
    weight = 0.1 * jax.random.normal(kw, (n_out, n_in, k_size), dtype=jnp.float32)

    def ref_conv(xi):
        p = ((k_size - 1) // 2) * dilation
        return lax.conv_general_dilated(
            xi, weight, window_strides=(stride,), padding=[(p, p)],
            rhs_dilation=(dilation,), dimension_numbers=("NCH", "OIH", "NCH"))

    # Short-sequence (batch-tiled, in-kernel padding) path.
    out = jax.block_until_ready(
        cdilated_forward(x, weight, stride=stride, dilation=dilation))
    ref = ref_conv(x)
    assert out.shape == ref.shape, (out.shape, ref.shape)
    assert jnp.allclose(out, ref, atol=1e-4, rtol=1e-4), float(jnp.max(jnp.abs(out - ref)))

    # Long-sequence path (L tiled into 3 x 512-lane tiles with halo blocks).
    x2 = jax.random.normal(kx2, (1, n_in, 1536), dtype=jnp.float32)
    out2 = jax.block_until_ready(
        cdilated_forward(x2, weight, stride=stride, dilation=dilation))
    ref2 = ref_conv(x2)
    assert out2.shape == ref2.shape, (out2.shape, ref2.shape)
    assert jnp.allclose(out2, ref2, atol=1e-4, rtol=1e-4), float(jnp.max(jnp.abs(out2 - ref2)))

    print("KERNEL_OK")
</pallas_src>

<mosaic_0001>
module attributes {stable_mosaic.version = 11 : i64} {
  func.func @_cdilated_full_kernel(%arg0: i32, %arg1: memref<1x4x16xf32, #tpu.memory_space<vmem>>, %arg2: memref<12x8x1xf32, #tpu.memory_space<vmem>>, %arg3: memref<1x8x16xf32, #tpu.memory_space<vmem>>) attributes {dimension_semantics = [#tpu.dimension_semantics<parallel>], iteration_bounds = array<i64: 2>, scalar_prefetch = 0 : i64, scratch_operands = 0 : i64, tpu.core_type = #tpu.core_type<tc>, window_params = [{transform_indices = @transform_0, window_bounds = array<i64: 1, 4, 16>}, {pipeline_mode = #tpu.pipeline_mode<synchronous>, transform_indices = @transform_1, window_bounds = array<i64: 12, 8, 1>}, {transform_indices = @transform_2, window_bounds = array<i64: 1, 8, 16>}]} {
    %c0 = arith.constant 0 : index
    %c0_0 = arith.constant 0 : index
    %c0_1 = arith.constant 0 : index
    %0 = vector.load %arg1[%c0, %c0_0, %c0_1] : memref<1x4x16xf32, #tpu.memory_space<vmem>>, vector<1x4x16xf32>
    %cst = arith.constant 0.000000e+00 : f32
    %1 = vector.broadcast %cst : f32 to vector<1x4x2xf32>
    %cst_2 = arith.constant 0.000000e+00 : f32
    %2 = vector.broadcast %cst_2 : f32 to vector<1x4x2xf32>
    %3 = tpu.concatenate %1, %0, %2 in 2 : vector<1x4x2xf32>, vector<1x4x16xf32>, vector<1x4x2xf32> -> vector<1x4x20xf32>
    %c0_3 = arith.constant 0 : index
    %c0_4 = arith.constant 0 : index
    %c0_5 = arith.constant 0 : index
    %4 = vector.load %arg2[%c0_3, %c0_4, %c0_5] : memref<12x8x1xf32, #tpu.memory_space<vmem>>, vector<12x8x1xf32>
    %cst_6 = arith.constant 0.000000e+00 : f32
    %5 = vector.broadcast %cst_6 : f32 to vector<1x8x16xf32>
    %6 = vector.extract_strided_slice %3 {offsets = [0, 0, 0], sizes = [1, 4, 16], strides = [1, 1, 1]} : vector<1x4x20xf32> to vector<1x4x16xf32>
    %7 = vector.extract_strided_slice %4 {offsets = [0, 0, 0], sizes = [1, 8, 1], strides = [1, 1, 1]} : vector<12x8x1xf32> to vector<1x8x1xf32>
    %8 = vector.shape_cast %7 : vector<1x8x1xf32> to vector<8x1xf32>
    %9 = vector.shape_cast %8 : vector<8x1xf32> to vector<1x8x1xf32>
    %10 = vector.extract_strided_slice %6 {offsets = [0, 0, 0], sizes = [1, 1, 16], strides = [1, 1, 1]} : vector<1x4x16xf32> to vector<1x1x16xf32>
    %11 = vector.broadcast %9 : vector<1x8x1xf32> to vector<1x8x16xf32>
    %12 = vector.broadcast %10 : vector<1x1x16xf32> to vector<1x8x16xf32>
    %13 = arith.mulf %11, %12 : vector<1x8x16xf32>
    %14 = arith.addf %5, %13 : vector<1x8x16xf32>
    %15 = vector.extract_strided_slice %4 {offsets = [1, 0, 0], sizes = [1, 8, 1], strides = [1, 1, 1]} : vector<12x8x1xf32> to vector<1x8x1xf32>
    %16 = vector.shape_cast %15 : vector<1x8x1xf32> to vector<8x1xf32>
    %17 = vector.shape_cast %16 : vector<8x1xf32> to vector<1x8x1xf32>
    %18 = vector.extract_strided_slice %6 {offsets = [0, 1, 0], sizes = [1, 1, 16], strides = [1, 1, 1]} : vector<1x4x16xf32> to vector<1x1x16xf32>
    %19 = vector.broadcast %17 : vector<1x8x1xf32> to vector<1x8x16xf32>
    %20 = vector.broadcast %18 : vector<1x1x16xf32> to vector<1x8x16xf32>
    %21 = arith.mulf %19, %20 : vector<1x8x16xf32>
    %22 = arith.addf %14, %21 : vector<1x8x16xf32>
    %23 = vector.extract_strided_slice %4 {offsets = [2, 0, 0], sizes = [1, 8, 1], strides = [1, 1, 1]} : vector<12x8x1xf32> to vector<1x8x1xf32>
    %24 = vector.shape_cast %23 : vector<1x8x1xf32> to vector<8x1xf32>
    %25 = vector.shape_cast %24 : vector<8x1xf32> to vector<1x8x1xf32>
    %26 = vector.extract_strided_slice %6 {offsets = [0, 2, 0], sizes = [1, 1, 16], strides = [1, 1, 1]} : vector<1x4x16xf32> to vector<1x1x16xf32>
    %27 = vector.broadcast %25 : vector<1x8x1xf32> to vector<1x8x16xf32>
    %28 = vector.broadcast %26 : vector<1x1x16xf32> to vector<1x8x16xf32>
    %29 = arith.mulf %27, %28 : vector<1x8x16xf32>
    %30 = arith.addf %22, %29 : vector<1x8x16xf32>
    %31 = vector.extract_strided_slice %4 {offsets = [3, 0, 0], sizes = [1, 8, 1], strides = [1, 1, 1]} : vector<12x8x1xf32> to vector<1x8x1xf32>
    %32 = vector.shape_cast %31 : vector<1x8x1xf32> to vector<8x1xf32>
    %33 = vector.shape_cast %32 : vector<8x1xf32> to vector<1x8x1xf32>
    %34 = vector.extract_strided_slice %6 {offsets = [0, 3, 0], sizes = [1, 1, 16], strides = [1, 1, 1]} : vector<1x4x16xf32> to vector<1x1x16xf32>
    %35 = vector.broadcast %33 : vector<1x8x1xf32> to vector<1x8x16xf32>
    %36 = vector.broadcast %34 : vector<1x1x16xf32> to vector<1x8x16xf32>
    %37 = arith.mulf %35, %36 : vector<1x8x16xf32>
    %38 = arith.addf %30, %37 : vector<1x8x16xf32>
    %39 = vector.extract_strided_slice %3 {offsets = [0, 0, 2], sizes = [1, 4, 16], strides = [1, 1, 1]} : vector<1x4x20xf32> to vector<1x4x16xf32>
    %40 = vector.extract_strided_slice %4 {offsets = [4, 0, 0], sizes = [1, 8, 1], strides = [1, 1, 1]} : vector<12x8x1xf32> to vector<1x8x1xf32>
    %41 = vector.shape_cast %40 : vector<1x8x1xf32> to vector<8x1xf32>
    %42 = vector.shape_cast %41 : vector<8x1xf32> to vector<1x8x1xf32>
    %43 = vector.extract_strided_slice %39 {offsets = [0, 0, 0], sizes = [1, 1, 16], strides = [1, 1, 1]} : vector<1x4x16xf32> to vector<1x1x16xf32>
    %44 = vector.broadcast %42 : vector<1x8x1xf32> to vector<1x8x16xf32>
    %45 = vector.broadcast %43 : vector<1x1x16xf32> to vector<1x8x16xf32>
    %46 = arith.mulf %44, %45 : vector<1x8x16xf32>
    %47 = arith.addf %38, %46 : vector<1x8x16xf32>
    %48 = vector.extract_strided_slice %4 {offsets = [5, 0, 0], sizes = [1, 8, 1], strides = [1, 1, 1]} : vector<12x8x1xf32> to vector<1x8x1xf32>
    %49 = vector.shape_cast %48 : vector<1x8x1xf32> to vector<8x1xf32>
    %50 = vector.shape_cast %49 : vector<8x1xf32> to vector<1x8x1xf32>
    %51 = vector.extract_strided_slice %39 {offsets = [0, 1, 0], sizes = [1, 1, 16], strides = [1, 1, 1]} : vector<1x4x16xf32> to vector<1x1x16xf32>
    %52 = vector.broadcast %50 : vector<1x8x1xf32> to vector<1x8x16xf32>
    %53 = vector.broadcast %51 : vector<1x1x16xf32> to vector<1x8x16xf32>
    %54 = arith.mulf %52, %53 : vector<1x8x16xf32>
    %55 = arith.addf %47, %54 : vector<1x8x16xf32>
    %56 = vector.extract_strided_slice %4 {offsets = [6, 0, 0], sizes = [1, 8, 1], strides = [1, 1, 1]} : vector<12x8x1xf32> to vector<1x8x1xf32>
    %57 = vector.shape_cast %56 : vector<1x8x1xf32> to vector<8x1xf32>
    %58 = vector.shape_cast %57 : vector<8x1xf32> to vector<1x8x1xf32>
    %59 = vector.extract_strided_slice %39 {offsets = [0, 2, 0], sizes = [1, 1, 16], strides = [1, 1, 1]} : vector<1x4x16xf32> to vector<1x1x16xf32>
    %60 = vector.broadcast %58 : vector<1x8x1xf32> to vector<1x8x16xf32>
    %61 = vector.broadcast %59 : vector<1x1x16xf32> to vector<1x8x16xf32>
    %62 = arith.mulf %60, %61 : vector<1x8x16xf32>
    %63 = arith.addf %55, %62 : vector<1x8x16xf32>
    %64 = vector.extract_strided_slice %4 {offsets = [7, 0, 0], sizes = [1, 8, 1], strides = [1, 1, 1]} : vector<12x8x1xf32> to vector<1x8x1xf32>
    %65 = vector.shape_cast %64 : vector<1x8x1xf32> to vector<8x1xf32>
    %66 = vector.shape_cast %65 : vector<8x1xf32> to vector<1x8x1xf32>
    %67 = vector.extract_strided_slice %39 {offsets = [0, 3, 0], sizes = [1, 1, 16], strides = [1, 1, 1]} : vector<1x4x16xf32> to vector<1x1x16xf32>
    %68 = vector.broadcast %66 : vector<1x8x1xf32> to vector<1x8x16xf32>
    %69 = vector.broadcast %67 : vector<1x1x16xf32> to vector<1x8x16xf32>
    %70 = arith.mulf %68, %69 : vector<1x8x16xf32>
    %71 = arith.addf %63, %70 : vector<1x8x16xf32>
    %72 = vector.extract_strided_slice %3 {offsets = [0, 0, 4], sizes = [1, 4, 16], strides = [1, 1, 1]} : vector<1x4x20xf32> to vector<1x4x16xf32>
    %73 = vector.extract_strided_slice %4 {offsets = [8, 0, 0], sizes = [1, 8, 1], strides = [1, 1, 1]} : vector<12x8x1xf32> to vector<1x8x1xf32>
    %74 = vector.shape_cast %73 : vector<1x8x1xf32> to vector<8x1xf32>
    %75 = vector.shape_cast %74 : vector<8x1xf32> to vector<1x8x1xf32>
    %76 = vector.extract_strided_slice %72 {offsets = [0, 0, 0], sizes = [1, 1, 16], strides = [1, 1, 1]} : vector<1x4x16xf32> to vector<1x1x16xf32>
    %77 = vector.broadcast %75 : vector<1x8x1xf32> to vector<1x8x16xf32>
    %78 = vector.broadcast %76 : vector<1x1x16xf32> to vector<1x8x16xf32>
    %79 = arith.mulf %77, %78 : vector<1x8x16xf32>
    %80 = arith.addf %71, %79 : vector<1x8x16xf32>
    %81 = vector.extract_strided_slice %4 {offsets = [9, 0, 0], sizes = [1, 8, 1], strides = [1, 1, 1]} : vector<12x8x1xf32> to vector<1x8x1xf32>
    %82 = vector.shape_cast %81 : vector<1x8x1xf32> to vector<8x1xf32>
    %83 = vector.shape_cast %82 : vector<8x1xf32> to vector<1x8x1xf32>
    %84 = vector.extract_strided_slice %72 {offsets = [0, 1, 0], sizes = [1, 1, 16], strides = [1, 1, 1]} : vector<1x4x16xf32> to vector<1x1x16xf32>
    %85 = vector.broadcast %83 : vector<1x8x1xf32> to vector<1x8x16xf32>
    %86 = vector.broadcast %84 : vector<1x1x16xf32> to vector<1x8x16xf32>
    %87 = arith.mulf %85, %86 : vector<1x8x16xf32>
    %88 = arith.addf %80, %87 : vector<1x8x16xf32>
    %89 = vector.extract_strided_slice %4 {offsets = [10, 0, 0], sizes = [1, 8, 1], strides = [1, 1, 1]} : vector<12x8x1xf32> to vector<1x8x1xf32>
    %90 = vector.shape_cast %89 : vector<1x8x1xf32> to vector<8x1xf32>
    %91 = vector.shape_cast %90 : vector<8x1xf32> to vector<1x8x1xf32>
    %92 = vector.extract_strided_slice %72 {offsets = [0, 2, 0], sizes = [1, 1, 16], strides = [1, 1, 1]} : vector<1x4x16xf32> to vector<1x1x16xf32>
    %93 = vector.broadcast %91 : vector<1x8x1xf32> to vector<1x8x16xf32>
    %94 = vector.broadcast %92 : vector<1x1x16xf32> to vector<1x8x16xf32>
    %95 = arith.mulf %93, %94 : vector<1x8x16xf32>
    %96 = arith.addf %88, %95 : vector<1x8x16xf32>
    %97 = vector.extract_strided_slice %4 {offsets = [11, 0, 0], sizes = [1, 8, 1], strides = [1, 1, 1]} : vector<12x8x1xf32> to vector<1x8x1xf32>
    %98 = vector.shape_cast %97 : vector<1x8x1xf32> to vector<8x1xf32>
    %99 = vector.shape_cast %98 : vector<8x1xf32> to vector<1x8x1xf32>
    %100 = vector.extract_strided_slice %72 {offsets = [0, 3, 0], sizes = [1, 1, 16], strides = [1, 1, 1]} : vector<1x4x16xf32> to vector<1x1x16xf32>
    %101 = vector.broadcast %99 : vector<1x8x1xf32> to vector<1x8x16xf32>
    %102 = vector.broadcast %100 : vector<1x1x16xf32> to vector<1x8x16xf32>
    %103 = arith.mulf %101, %102 : vector<1x8x16xf32>
    %104 = arith.addf %96, %103 : vector<1x8x16xf32>
    %c0_7 = arith.constant 0 : index
    %c0_8 = arith.constant 0 : index
    %c0_9 = arith.constant 0 : index
    %105 = vector.load %arg3[%c0_7, %c0_8, %c0_9] : memref<1x8x16xf32, #tpu.memory_space<vmem>>, vector<1x8x16xf32>
    tpu.vector_store %arg3[%c0_7, %c0_8, %c0_9], %104 {strides = array<i32>} : memref<1x8x16xf32, #tpu.memory_space<vmem>>, vector<1x8x16xf32>,
    return
  }
  func.func @transform_0(%arg0: i32) -> (i32, i32, i32) {
    %c0_i32 = arith.constant 0 : i32
    %c0_i32_0 = arith.constant 0 : i32
    %c0_i32_1 = arith.constant 0 : i32
    return %arg0, %c0_i32, %c0_i32_0 : i32, i32, i32
  }
  func.func @transform_1(%arg0: i32) -> (i32, i32, i32) {
    %c0_i32 = arith.constant 0 : i32
    %c0_i32_0 = arith.constant 0 : i32
    %c0_i32_1 = arith.constant 0 : i32
    %c0_i32_2 = arith.constant 0 : i32
    return %c0_i32, %c0_i32_0, %c0_i32_1 : i32, i32, i32
  }
  func.func @transform_2(%arg0: i32) -> (i32, i32, i32) {
    %c0_i32 = arith.constant 0 : i32
    %c0_i32_0 = arith.constant 0 : i32
    %c0_i32_1 = arith.constant 0 : i32
    return %arg0, %c0_i32, %c0_i32_0 : i32, i32, i32
  }
}

</mosaic_0001>

<llo_original>
// kernel: tpu_custom_call.1
$region0: #{tpu_custom_call.1}
  #allocation0 [shape = 'u32[]', space=smem, size = 0x4, offset = 0x4, fixed_abs, tag = 'smem constant byte address 0x4 - core index']
  #allocation1 [shape = 'u32[144,128]{1,0:T(1,128)}', space=vmem, size = 0x12000, scoped, tag = 'internal scratch']
  %s0 = inlined_call_operand.vmem [shape: f32[2,4,16], index: 0, kind: input, shape index: {}]
  %s1 = inlined_call_operand.vmem [shape: f32[12,8,1], index: 1, kind: input, shape index: {}]
  %s2 = inlined_call_operand.hbm [shape: f32[2,8,16], index: 2, kind: output, shape index: {}]
  %s3 = sld [smem:[#allocation0]]
  $region41: #{tpu_custom_call.1} parent=0
    _
  %s5 = ssub.s32 1, %s3
  %s6 = scalar_select 0, %s5, %s3
  $region1: #{tpu_custom_call.1} parent=0
    #allocation2 [shape = 'u8[8192]{0}', space=vmem, size = 0x2000, scoped, tag = 'output window, operand 0']
    #allocation3 [shape = 's32[2]{0}', space=sflag, size = 0x8, scoped, tag = 'scoped memory for tpu_custom_call.1']
    %7 = vsyncpa [#allocation3], 0
    %s8 = scalar_lea.sflag [#allocation3], 1
    %9 = vsyncpa %s8, 0
    loop: start=0, step=1, limit=4
    $region2: #{tpu_custom_call.1} parent=1 // loop_pre_header
      _
    $region3: #{tpu_custom_call.1} parent=1 // loop_header
      %s11 = sphi 0, %s15
      %p12 = scmp.ge.s32.totalorder %s11, 4
      %s21 = sphi 0, %s23
      %s24 = sphi 0, %s21
      %s25 = sphi 0, %s24
      %s41 = sphi 0, %s25
      %s45 = sphi 0, %s45
      %s47 = sphi 0, %s45
      %s48 = sphi 0, %s47
      %s62 = sphi 0, %s48
      %s68 = sphi 0, %s70
      %s71 = sphi 0, %s68
      %s72 = sphi 0, %s71
      %s88 = sphi 0, %s72
    $region4: #{tpu_custom_call.1} parent=1 // loop_header_branch
      %14 = sbr.rel (%p12) target = $region8
    $region5: #{tpu_custom_call.1} parent=1 // loop_body
      %s16 = ssub.s32 %s11, 1
      %s17 = ssub.s32 %s11, 2
      %s18 = sadd.s32 %s11, 1
      %s19 = ssub.s32 %s11, %s18
      %p20 = scmp.eq.s32.totalorder %s19, 0
      %s22 = sadd.s32 %s21, 1
      %s23 = scalar_select %p20, %s21, %s22
      %p26 = pneg %p20
      %p27 = scmp.eq.s32.totalorder %s11, 1
      %p28 = por %p26, %p27
      %p29 = scmp.ne.s32.totalorder %s21, %s24
      %p30 = scmp.eq.s32.totalorder %s11, 0
      %p31 = por %p29, %p30
      %p32 = scmp.ne.s32.totalorder %s21, %s24
      %p33 = scmp.eq.s32.totalorder %s16, 1
      %p34 = por %p32, %p33
      %p35 = scmp.ne.s32.totalorder %s24, %s25
      %p36 = scmp.eq.s32.totalorder %s16, 0
      %p37 = por %p35, %p36
      %p38 = scmp.ne.s32.totalorder %s24, %s25
      %p39 = scmp.eq.s32.totalorder %s17, 1
      %p40 = por %p38, %p39
      %p42 = scmp.ne.s32.totalorder %s25, %s41
      %p43 = scmp.eq.s32.totalorder %s17, 0
      %p44 = por %p42, %p43
      %s46 = sadd.s32 %s45, 1
      %p49 = scmp.eq.s32.totalorder %s11, 1
      %p50 = scmp.ne.s32.totalorder %s45, %s47
      %p51 = scmp.eq.s32.totalorder %s11, 0
      %p52 = por %p50, %p51
      %p53 = scmp.ne.s32.totalorder %s45, %s47
      %p54 = scmp.eq.s32.totalorder %s16, 1
      %p55 = por %p53, %p54
      %p56 = scmp.ne.s32.totalorder %s47, %s48
      %p57 = scmp.eq.s32.totalorder %s16, 0
      %p58 = por %p56, %p57
      %p59 = scmp.ne.s32.totalorder %s47, %s48
      %p60 = scmp.eq.s32.totalorder %s17, 1
      %p61 = por %p59, %p60
      %p63 = scmp.ne.s32.totalorder %s48, %s62
      %p64 = scmp.eq.s32.totalorder %s17, 0
      %p65 = por %p63, %p64
      %s66 = ssub.s32 %s11, %s18
      %p67 = scmp.eq.s32.totalorder %s66, 0
      %s69 = sadd.s32 %s68, 1
      %s70 = scalar_select %p67, %s68, %s69
      %p73 = pneg %p67
      %p74 = scmp.eq.s32.totalorder %s11, 1
      %p75 = por %p73, %p74
      %p76 = scmp.ne.s32.totalorder %s68, %s71
      %p77 = scmp.eq.s32.totalorder %s11, 0
      %p78 = por %p76, %p77
      %p79 = scmp.ne.s32.totalorder %s68, %s71
      %p80 = scmp.eq.s32.totalorder %s16, 1
      %p81 = por %p79, %p80
      %p82 = scmp.ne.s32.totalorder %s71, %s72
      %p83 = scmp.eq.s32.totalorder %s16, 0
      %p84 = por %p82, %p83
      %p85 = scmp.ne.s32.totalorder %s71, %s72
      %p86 = scmp.eq.s32.totalorder %s17, 1
      %p87 = por %p85, %p86
      %p89 = scmp.ne.s32.totalorder %s72, %s88
      %p90 = scmp.eq.s32.totalorder %s17, 0
      %p91 = por %p89, %p90
      %p92 = scmp.le.s32.totalorder 1, %s11
      %p93 = scmp.lt.s32.totalorder %s11, 3
      %p94 = pnand %p92, %p93
      %p95 = pneg %p94
      // Predicated region
      $region9: #{tpu_custom_call.1} parent=5 // pred_check
        _
      $region10: #{tpu_custom_call.1} parent=5 // pred_check_branch
        %97 = sbr.rel (%p94) target = $region12
      $region11: #{tpu_custom_call.1} parent=5 // pred_region
        %s98 = ssub.s32 %s11, 1
        // Predicated region
        $region13: #{tpu_custom_call.1} parent=11 // pred_check
          %p99 = pneg %p58
        $region14: #{tpu_custom_call.1} parent=11 // pred_check_branch
          %101 = sbr.rel (%p99) target = $region16
        $region15: #{tpu_custom_call.1} parent=11 // pred_region
          _
        $region16: #{tpu_custom_call.1} parent=11 // pred_fallthru
          _
      $region12: #{tpu_custom_call.1} parent=5 // pred_fallthru
        _
      %p102 = scmp.lt.s32.totalorder %s11, 2
      // Predicated region
      $region17: #{tpu_custom_call.1} parent=5 // pred_check
        %p103 = pneg %p102
      $region18: #{tpu_custom_call.1} parent=5 // pred_check_branch
        %105 = sbr.rel (%p103) target = $region20
      $region19: #{tpu_custom_call.1} parent=5 // pred_region
        // Predicated region
        $region21: #{tpu_custom_call.1} parent=19 // pred_check
          %p106 = pneg %p31
        $region22: #{tpu_custom_call.1} parent=19 // pred_check_branch
          %108 = sbr.rel (%p106) target = $region24
        $region23: #{tpu_custom_call.1} parent=19 // pred_region
          %p109 = scmp.lt.s32.totalorder %s11, 1
          %s110 = scalar_select %p109, %s11, 1
          %s111 = smul.addr %s110, 4
          %s112 = scalar_lea.vmem %s0, %s111
        $region24: #{tpu_custom_call.1} parent=19 // pred_fallthru
          _
      $region20: #{tpu_custom_call.1} parent=5 // pred_fallthru
        _
      %p113 = scmp.le.s32.totalorder 1, %s11
      %p114 = scmp.lt.s32.totalorder %s11, 3
      %p115 = pnand %p113, %p114
      %p116 = pneg %p115
      // Predicated region
      $region25: #{tpu_custom_call.1} parent=5 // pred_check
        _
      $region26: #{tpu_custom_call.1} parent=5 // pred_check_branch
        %118 = sbr.rel (%p115) target = $region28
      $region27: #{tpu_custom_call.1} parent=5 // pred_region
        %s119 = ssub.s32 %s11, 1
        %p120 = scmp.lt.s32.totalorder %s16, 1
        %s121 = scalar_select %p120, %s16, 1
        %s122 = smul.addr %s121, 4
        %s123 = scalar_lea.vmem %s0, %s122
        %p124 = pneg %p37
        %p125 = pneg %p34
        %p126 = pneg %p58
        %p127 = pneg %p55
        %p128 = pneg %p84
        %p129 = pneg %p81
        %s130 = sand.u32 %s71, 1
        %s131 = scalar_lea.sflag [#allocation3], %s130
        %s132 = sand.u32 %s71, 1
        %s133 = smul.addr %s132, 8
        %s134 = scalar_lea.vmem [#allocation2], %s133
        %p135 = scmp.lt.s32.totalorder %s16, 1
        %s136 = scalar_select %p135, %s16, 1
        %s137 = smul.addr %s136, 4
        %s138 = scalar_lea.vmem %s0, %s137
        %v139 = vld [vmem:[%s138] sm:$0xf]
        %141 = vrot.lane.b32.xlu0 %v139, 2
        %v142 = vpop.permute.xlu0 %141
        %vm144 = vcmask 15360
        %v145 = vsel %vm144, 0.0, %v142
        %vm146 = vcmask 146432
        %v147 = vsel %vm146, %v145, 0.0
        %v148 = vld [vmem:[%s1] sm:$0xff]
        %v149 = vld [vmem:[%s1 + $0x8] sm:$0xff]
        %v150 = vld [vmem:[%s1 + $0x10] sm:$0xff]
        %v151 = vld [vmem:[%s1 + $0x18] sm:$0xff]
        %v152 = vld [vmem:[%s1 + $0x20] sm:$0xff]
        %v153 = vld [vmem:[%s1 + $0x28] sm:$0xff]
        %v154 = vld [vmem:[%s1 + $0x30] sm:$0xff]
        %v155 = vld [vmem:[%s1 + $0x38] sm:$0xff]
        %v156 = vld [vmem:[%s1 + $0x40] sm:$0xff]
        %v157 = vld [vmem:[%s1 + $0x48] sm:$0xff]
        %v158 = vld [vmem:[%s1 + $0x50] sm:$0xff]
        %v159 = vld [vmem:[%s1 + $0x58] sm:$0xff]
        %161 = vset.pattern.permute.xlu0 0
        %162 = vperm.xlu0 %161, %v148
        %v163 = vpop.permute.xlu0 %162
        %v165 = vlaneseq
        %v166 = vshrl.u32 %v165, 7
        %v167 = vsub.s32 0, %v166
        %v168 = vrot.slane %v147, %v167
        %v169 = vmul.f32 %v163, %v168
        %v170 = vadd.f32 %v169, 0.0
        %172 = vset.pattern.permute.xlu0 0
        %173 = vperm.xlu0 %172, %v149
        %v174 = vpop.permute.xlu0 %173
        %v176 = vlaneseq
        %v177 = vshrl.u32 %v176, 7
        %v178 = vsub.s32 1, %v177
        %v179 = vrot.slane %v147, %v178
        %v180 = vmul.f32 %v174, %v179
        %v181 = vadd.f32 %v170, %v180
        %183 = vset.pattern.permute.xlu0 0
        %184 = vperm.xlu0 %183, %v150
        %v185 = vpop.permute.xlu0 %184
        %v187 = vlaneseq
        %v188 = vshrl.u32 %v187, 7
        %v189 = vsub.s32 2, %v188
        %v190 = vrot.slane %v147, %v189
        %v191 = vmul.f32 %v185, %v190
        %v192 = vadd.f32 %v181, %v191
        %194 = vset.pattern.permute.xlu0 0
        %195 = vperm.xlu0 %194, %v151
        %v196 = vpop.permute.xlu0 %195
        %v198 = vlaneseq
        %v199 = vshrl.u32 %v198, 7
        %v200 = vsub.s32 3, %v199
        %v201 = vrot.slane %v147, %v200
        %v202 = vmul.f32 %v196, %v201
        %v203 = vadd.f32 %v192, %v202
        %205 = vset.pattern.permute.xlu0 0
        %206 = vperm.xlu0 %205, %v152
        %v207 = vpop.permute.xlu0 %206
        %v209 = vmul.f32 %v207, %v168
        %211 = vrot.lane.b32.xlu0 %v209, 126
        %v212 = vpop.permute.xlu0 %211
        %v214 = vadd.f32 %v203, %v212
        %216 = vset.pattern.permute.xlu0 0
        %217 = vperm.xlu0 %216, %v153
        %v218 = vpop.permute.xlu0 %217
        %v220 = vmul.f32 %v218, %v179
        %222 = vrot.lane.b32.xlu0 %v220, 126
        %v223 = vpop.permute.xlu0 %222
        %v225 = vadd.f32 %v214, %v223
        %227 = vset.pattern.permute.xlu0 0
        %228 = vperm.xlu0 %227, %v154
        %v229 = vpop.permute.xlu0 %228
        %v231 = vmul.f32 %v229, %v190
        %233 = vrot.lane.b32.xlu0 %v231, 126
        %v234 = vpop.permute.xlu0 %233
        %v236 = vadd.f32 %v225, %v234
        %238 = vset.pattern.permute.xlu0 0
        %239 = vperm.xlu0 %238, %v155
        %v240 = vpop.permute.xlu0 %239
        %v242 = vmul.f32 %v240, %v201
        %244 = vrot.lane.b32.xlu0 %v242, 126
        %v245 = vpop.permute.xlu0 %244
        %v247 = vadd.f32 %v236, %v245
        %249 = vset.pattern.permute.xlu0 0
        %250 = vperm.xlu0 %249, %v156
        %v251 = vpop.permute.xlu0 %250
        %v253 = vmul.f32 %v251, %v168
        %255 = vrot.lane.b32.xlu0 %v253, 124
        %v256 = vpop.permute.xlu0 %255
        %v258 = vadd.f32 %v247, %v256
        %260 = vset.pattern.permute.xlu0 0
        %261 = vperm.xlu0 %260, %v157
        %v262 = vpop.permute.xlu0 %261
        %v264 = vmul.f32 %v262, %v179
        %266 = vrot.lane.b32.xlu0 %v264, 124
        %v267 = vpop.permute.xlu0 %266
        %v269 = vadd.f32 %v258, %v267
        %271 = vset.pattern.permute.xlu0 0
        %272 = vperm.xlu0 %271, %v158
        %v273 = vpop.permute.xlu0 %272
        %v275 = vmul.f32 %v273, %v190
        %277 = vrot.lane.b32.xlu0 %v275, 124
        %v278 = vpop.permute.xlu0 %277
        %v280 = vadd.f32 %v269, %v278
        %282 = vset.pattern.permute.xlu0 0
        %283 = vperm.xlu0 %282, %v159
        %v284 = vpop.permute.xlu0 %283
        %v286 = vmul.f32 %v284, %v201
        %288 = vrot.lane.b32.xlu0 %v286, 124
        %v289 = vpop.permute.xlu0 %288
        %v291 = vadd.f32 %v280, %v289
        %vm292 = vcmask 130048
        %293 = vst.msk [vmem:[%s134] sm:$0xff] %vm292, %v291
        %s294 = sand.u32 %s71, 1
        %s295 = scalar_lea.sflag [#allocation3], %s294
        %s296 = sand.u32 %s71, 1
        %s297 = smul.addr %s296, 8
        %s298 = scalar_lea.vmem [#allocation2], %s297
        // Predicated region
        $region29: #{tpu_custom_call.1} parent=27 // pred_check
          %p299 = pneg %p81
        $region30: #{tpu_custom_call.1} parent=27 // pred_check_branch
          %301 = sbr.rel (%p299) target = $region32
        $region31: #{tpu_custom_call.1} parent=27 // pred_region
          %s303 = ssub.s32 128, 128
          %304 = vsyncadd %s295, %s303
          %s305 = smul.addr %s16, 128
          %s306 = scalar_lea.hbm %s2, %s305
          %s308 = sshll.u32 %s298, 4
          %s309 = int_to_ptr.vmem [resolvable:$true] %s308
          %311 = dma.vmem_to_hbm [thread:$0]  %s309, 128, %s306, %s295
        $region32: #{tpu_custom_call.1} parent=27 // pred_fallthru
          _
      $region28: #{tpu_custom_call.1} parent=5 // pred_fallthru
        _
      %p312 = scmp.le.s32.totalorder 2, %s11
      // Predicated region
      $region33: #{tpu_custom_call.1} parent=5 // pred_check
        %p313 = pneg %p312
      $region34: #{tpu_custom_call.1} parent=5 // pred_check_branch
        %315 = sbr.rel (%p313) target = $region36
      $region35: #{tpu_custom_call.1} parent=5 // pred_region
        %s316 = ssub.s32 %s11, 2
        // Predicated region
        $region37: #{tpu_custom_call.1} parent=35 // pred_check
          %p317 = pneg %p87
        $region38: #{tpu_custom_call.1} parent=35 // pred_check_branch
          %319 = sbr.rel (%p317) target = $region40
        $region39: #{tpu_custom_call.1} parent=35 // pred_region
          %s320 = sand.u32 %s72, 1
          %s321 = scalar_lea.sflag [#allocation3], %s320
          %s322 = sand.u32 %s72, 1
          %s323 = smul.addr %s322, 8
          %s324 = scalar_lea.vmem [#allocation2], %s323
          %325 = dma.done %s321, 128
        $region40: #{tpu_custom_call.1} parent=35 // pred_fallthru
          _
      $region36: #{tpu_custom_call.1} parent=5 // pred_fallthru
        _
    $region6: #{tpu_custom_call.1} parent=1 // loop_footer
      %s15 = sadd.s32 1, %s11
    $region7: #{tpu_custom_call.1} parent=1 // loop_footer_branch
      %10 = sbr.rel target = $region3
    $region8: #{tpu_custom_call.1} parent=1 // loop_exit
      _
    %326 = vsyncpa [#allocation3], 1
    %s327 = scalar_lea.sflag [#allocation3], 1
    %328 = vsyncpa %s327, 1

</llo_original>
